<compile_context>
chip_gen: v7x
topology: tpu7x:2x2x1
jax: 0.10.0
libtpu: 0.0.40
codegen_flags: <defaults>
</compile_context>

<pallas_src>
import jax
import jax.numpy as jnp
from jax.experimental import pallas as pl
from jax.experimental.pallas import tpu as pltpu


def _disc_kernel(x_ref, w1_ref, b1_ref, w2_ref, b2_ref, w3_ref, b3_ref, o_ref):
    # x arrives f32 straight from HBM; the bf16 cast happens here on the VPU so
    # the wrapper never makes a separate HBM round-trip over x.
    x = x_ref[...].astype(jnp.bfloat16)

    # Layer 1: Linear(784 -> 256) + LeakyReLU(0.2)   (bf16 MXU, f32 accumulate)
    h1 = jnp.dot(x, w1_ref[...], preferred_element_type=jnp.float32)
    h1 = h1 + b1_ref[...]                      # (1,256) broadcasts over batch tile
    h1 = jnp.where(h1 > 0, h1, 0.2 * h1)

    # Layer 2: Linear(256 -> 256) + LeakyReLU(0.2)
    h2 = jnp.dot(h1.astype(jnp.bfloat16), w2_ref[...],
                 preferred_element_type=jnp.float32)
    h2 = h2 + b2_ref[...]
    h2 = jnp.where(h2 > 0, h2, 0.2 * h2)

    # Layer 3: Linear(256 -> 1) as VPU multiply + lane reduction (an N=1 MXU
    # pass would be wasted), then Sigmoid via EUP exp + approx reciprocal.
    z = jnp.sum(h2 * w3_ref[...], axis=-1, keepdims=True) + b3_ref[...]
    o_ref[...] = pl.reciprocal(1.0 + jnp.exp(-z), approx=True)


def _round_up(n, m):
    return (n + m - 1) // m * m


def _choose_tile(batch, block_batch):
    # Guard: block_batch must be a sublane multiple.
    block_batch = max(8, _round_up(block_batch, 8))
    b8 = _round_up(batch, 8)
    # Aim for >= 4 grid steps on large batches (>= 2 per TensorCore on v7x),
    # with a 256-row floor so tiles stay DMA-efficient, capped by block_batch
    # (VMEM budget) and by the 8-rounded batch itself.
    quarter = _round_up(pl.cdiv(batch, 4), 8)
    return min(max(quarter, 256), block_batch, b8)


def discriminator_forward(x, params, *, block_batch=1024):
    """x: [B, 784] float32 -> [B] float32 (matches torch's squeeze(-1))."""
    w1, b1, w2, b2, w3, b3 = params
    B = x.shape[0]

    tb = _choose_tile(B, block_batch)
    grid = (pl.cdiv(B, tb),)  # ragged final block: OOB rows masked on writeback

    # bf16 weights for the MXU; layer-3 weight as an f32 row for the VPU reduce.
    w1_bf = w1.astype(jnp.bfloat16)
    w2_bf = w2.astype(jnp.bfloat16)
    w3_row = jnp.reshape(w3, (1, 256)).astype(jnp.float32)

    flops = 2 * B * (784 * 256 + 256 * 256 + 256)
    bytes_accessed = (B * 784 * 4 + B * 4
                      + (784 * 256 + 256 * 256) * 2
                      + (256 + 256 + 256 + 1) * 4)

    # TODO(synk): K=784 is not a multiple of 128; accepting ~14% layer-1 MXU
    # layout padding (only matters on MXU-bound v5e) rather than pre-padding
    # x/w1 to 896 columns.
    out = pl.pallas_call(
        _disc_kernel,
        out_shape=jax.ShapeDtypeStruct((B, 1), jnp.float32),
        grid=grid,
        in_specs=[
            pl.BlockSpec((tb, 784), lambda i: (i, 0)),    # x tile (pipelined)
            pl.BlockSpec((784, 256), lambda i: (0, 0)),   # w1 (VMEM-resident)
            pl.BlockSpec((1, 256), lambda i: (0, 0)),     # b1
            pl.BlockSpec((256, 256), lambda i: (0, 0)),   # w2 (VMEM-resident)
            pl.BlockSpec((1, 256), lambda i: (0, 0)),     # b2
            pl.BlockSpec((1, 256), lambda i: (0, 0)),     # w3 row
            pl.BlockSpec((1, 1), lambda i: (0, 0)),       # b3
        ],
        out_specs=pl.BlockSpec((tb, 1), lambda i: (i, 0)),
        compiler_params=pltpu.CompilerParams(
            dimension_semantics=("parallel",),
        ),
        cost_estimate=pl.CostEstimate(
            flops=flops, transcendentals=B, bytes_accessed=bytes_accessed),
    )(x, w1_bf, b1, w2_bf, b2, w3_row, b3)

    return out[:, 0]  # squeeze(-1)


def init_params():
    """Deterministic synthetic parameters with the same shapes as the module."""
    keys = jax.random.split(jax.random.PRNGKey(42), 6)
    # Stored as [in, out] (transposed vs torch's [out, in]) so the kernel can do
    # x @ W directly. Biases kept 2D for TPU layout.
    w1 = jax.random.normal(keys[0], (784, 256), jnp.float32) * 0.03
    b1 = jax.random.normal(keys[1], (1, 256), jnp.float32) * 0.01
    w2 = jax.random.normal(keys[2], (256, 256), jnp.float32) * 0.05
    b2 = jax.random.normal(keys[3], (1, 256), jnp.float32) * 0.01
    w3 = jax.random.normal(keys[4], (256, 1), jnp.float32) * 0.05
    b3 = jax.random.normal(keys[5], (1, 1), jnp.float32) * 0.01
    return (w1, b1, w2, b2, w3, b3)


def _reference_forward(x, params):
    """Pure-JAX f32 reference for sanity checking."""
    w1, b1, w2, b2, w3, b3 = params
    h = x @ w1 + b1
    h = jnp.where(h > 0, h, 0.2 * h)
    h = h @ w2 + b2
    h = jnp.where(h > 0, h, 0.2 * h)
    z = h @ w3 + b3
    return jax.nn.sigmoid(z)[:, 0]


if __name__ == "__main__":
    params = init_params()

    # Small batch (single grid step).
    B = 8
    x = jax.random.normal(jax.random.PRNGKey(0), (B, 784), jnp.float32)
    y = discriminator_forward(x, params)
    jax.block_until_ready(y)
    y_ref = _reference_forward(x, params)
    assert y.shape == (B,), y.shape
    assert jnp.allclose(y, y_ref, atol=1e-2, rtol=1e-2), (y, y_ref)

    # Larger, non-divisible batch to exercise the multi-step grid and the
    # ragged (masked) final block path — no wrapper-side padding anymore.
    B2 = 300
    x2 = jax.random.normal(jax.random.PRNGKey(1), (B2, 784), jnp.float32)
    y2 = discriminator_forward(x2, params, block_batch=128)
    jax.block_until_ready(y2)
    y2_ref = _reference_forward(x2, params)
    assert y2.shape == (B2,), y2.shape
    assert jnp.allclose(y2, y2_ref, atol=1e-2, rtol=1e-2), (y2, y2_ref)

    print("KERNEL_OK")
</pallas_src>

<mosaic_0001>
module attributes {stable_mosaic.version = 11 : i64} {
  func.func @_disc_kernel(%arg0: i32, %arg1: memref<8x784xf32, #tpu.memory_space<vmem>>, %arg2: memref<784x256xbf16, #tpu.memory_space<vmem>>, %arg3: memref<1x256xf32, #tpu.memory_space<vmem>>, %arg4: memref<256x256xbf16, #tpu.memory_space<vmem>>, %arg5: memref<1x256xf32, #tpu.memory_space<vmem>>, %arg6: memref<1x256xf32, #tpu.memory_space<vmem>>, %arg7: memref<1x1xf32, #tpu.memory_space<vmem>>, %arg8: memref<8x1xf32, #tpu.memory_space<vmem>>) attributes {dimension_semantics = [#tpu.dimension_semantics<parallel>], iteration_bounds = array<i64: 1>, scalar_prefetch = 0 : i64, scratch_operands = 0 : i64, tpu.core_type = #tpu.core_type<tc>, window_params = [{transform_indices = @transform_0, window_bounds = array<i64: 8, 784>}, {pipeline_mode = #tpu.pipeline_mode<synchronous>, transform_indices = @transform_1, window_bounds = array<i64: 784, 256>}, {pipeline_mode = #tpu.pipeline_mode<synchronous>, transform_indices = @transform_2, window_bounds = array<i64: 1, 256>}, {pipeline_mode = #tpu.pipeline_mode<synchronous>, transform_indices = @transform_3, window_bounds = array<i64: 256, 256>}, {pipeline_mode = #tpu.pipeline_mode<synchronous>, transform_indices = @transform_4, window_bounds = array<i64: 1, 256>}, {pipeline_mode = #tpu.pipeline_mode<synchronous>, transform_indices = @transform_5, window_bounds = array<i64: 1, 256>}, {pipeline_mode = #tpu.pipeline_mode<synchronous>, transform_indices = @transform_6, window_bounds = array<i64: 1, 1>}, {transform_indices = @transform_7, window_bounds = array<i64: 8, 1>}]} {
    %c0 = arith.constant 0 : index
    %c0_0 = arith.constant 0 : index
    %0 = vector.load %arg1[%c0, %c0_0] : memref<8x784xf32, #tpu.memory_space<vmem>>, vector<8x784xf32>
    %1 = arith.truncf %0 : vector<8x784xf32> to vector<8x784xbf16>
    %c0_1 = arith.constant 0 : index
    %c0_2 = arith.constant 0 : index
    %2 = vector.load %arg2[%c0_1, %c0_2] : memref<784x256xbf16, #tpu.memory_space<vmem>>, vector<784x256xbf16>
    %cst = arith.constant dense<0.000000e+00> : vector<8x256xf32>
    %3 = tpu.matmul %1, %2, %cst {dimension_numbers = #tpu.dot_dimension_numbers<[1], [0], [0], [1], [0, 0, 1, 1], [], []>} : vector<8x784xbf16>, vector<784x256xbf16>, vector<8x256xf32> -> vector<8x256xf32>
    %c0_3 = arith.constant 0 : index
    %c0_4 = arith.constant 0 : index
    %4 = vector.load %arg3[%c0_3, %c0_4] : memref<1x256xf32, #tpu.memory_space<vmem>>, vector<1x256xf32>
    %5 = vector.broadcast %4 : vector<1x256xf32> to vector<8x256xf32>
    %6 = arith.addf %3, %5 : vector<8x256xf32>
    %cst_5 = arith.constant 0.000000e+00 : f32
    %7 = vector.broadcast %cst_5 : f32 to vector<8x256xf32>
    %8 = arith.cmpf ogt, %6, %7 : vector<8x256xf32>
    %cst_6 = arith.constant 2.000000e-01 : f32
    %9 = vector.broadcast %cst_6 : f32 to vector<8x256xf32>
    %10 = arith.mulf %9, %6 : vector<8x256xf32>
    %11 = arith.select %8, %6, %10 : vector<8x256xi1>, vector<8x256xf32>
    %12 = arith.truncf %11 : vector<8x256xf32> to vector<8x256xbf16>
    %c0_7 = arith.constant 0 : index
    %c0_8 = arith.constant 0 : index
    %13 = vector.load %arg4[%c0_7, %c0_8] : memref<256x256xbf16, #tpu.memory_space<vmem>>, vector<256x256xbf16>
    %cst_9 = arith.constant dense<0.000000e+00> : vector<8x256xf32>
    %14 = tpu.matmul %12, %13, %cst_9 {dimension_numbers = #tpu.dot_dimension_numbers<[1], [0], [0], [1], [0, 0, 1, 1], [], []>} : vector<8x256xbf16>, vector<256x256xbf16>, vector<8x256xf32> -> vector<8x256xf32>
    %c0_10 = arith.constant 0 : index
    %c0_11 = arith.constant 0 : index
    %15 = vector.load %arg5[%c0_10, %c0_11] : memref<1x256xf32, #tpu.memory_space<vmem>>, vector<1x256xf32>
    %16 = vector.broadcast %15 : vector<1x256xf32> to vector<8x256xf32>
    %17 = arith.addf %14, %16 : vector<8x256xf32>
    %cst_12 = arith.constant 0.000000e+00 : f32
    %18 = vector.broadcast %cst_12 : f32 to vector<8x256xf32>
    %19 = arith.cmpf ogt, %17, %18 : vector<8x256xf32>
    %cst_13 = arith.constant 2.000000e-01 : f32
    %20 = vector.broadcast %cst_13 : f32 to vector<8x256xf32>
    %21 = arith.mulf %20, %17 : vector<8x256xf32>
    %22 = arith.select %19, %17, %21 : vector<8x256xi1>, vector<8x256xf32>
    %c0_14 = arith.constant 0 : index
    %c0_15 = arith.constant 0 : index
    %23 = vector.load %arg6[%c0_14, %c0_15] : memref<1x256xf32, #tpu.memory_space<vmem>>, vector<1x256xf32>
    %24 = vector.broadcast %23 : vector<1x256xf32> to vector<8x256xf32>
    %25 = arith.mulf %22, %24 : vector<8x256xf32>
    %cst_16 = arith.constant dense<0.000000e+00> : vector<8xf32>
    %26 = vector.multi_reduction <add>, %25, %cst_16 [1] : vector<8x256xf32> to vector<8xf32>
    %27 = vector.shape_cast %26 : vector<8xf32> to vector<8x1xf32>
    %c0_17 = arith.constant 0 : index
    %c0_18 = arith.constant 0 : index
    %28 = vector.load %arg7[%c0_17, %c0_18] : memref<1x1xf32, #tpu.memory_space<vmem>>, vector<1x1xf32>
    %29 = vector.broadcast %28 : vector<1x1xf32> to vector<8x1xf32>
    %30 = arith.addf %27, %29 : vector<8x1xf32>
    %cst_19 = arith.constant 0.000000e+00 : f32
    %31 = vector.broadcast %cst_19 : f32 to vector<8x1xf32>
    %32 = arith.subf %31, %30 : vector<8x1xf32>
    %33 = math.exp %32 : vector<8x1xf32>
    %cst_20 = arith.constant 1.000000e+00 : f32
    %34 = vector.broadcast %cst_20 : f32 to vector<8x1xf32>
    %35 = arith.addf %34, %33 : vector<8x1xf32>
    %36 = tpu.reciprocal %35 {approx = true} : vector<8x1xf32> -> vector<8x1xf32>
    %c0_21 = arith.constant 0 : index
    %c0_22 = arith.constant 0 : index
    %37 = vector.load %arg8[%c0_21, %c0_22] : memref<8x1xf32, #tpu.memory_space<vmem>>, vector<8x1xf32>
    tpu.vector_store %arg8[%c0_21, %c0_22], %36 {strides = array<i32>} : memref<8x1xf32, #tpu.memory_space<vmem>>, vector<8x1xf32>,
    return
  }
  func.func @transform_0(%arg0: i32) -> (i32, i32) {
    %c0_i32 = arith.constant 0 : i32
    %c0_i32_0 = arith.constant 0 : i32
    return %arg0, %c0_i32 : i32, i32
  }
  func.func @transform_1(%arg0: i32) -> (i32, i32) {
    %c0_i32 = arith.constant 0 : i32
    %c0_i32_0 = arith.constant 0 : i32
    %c0_i32_1 = arith.constant 0 : i32
    return %c0_i32, %c0_i32_0 : i32, i32
  }
  func.func @transform_2(%arg0: i32) -> (i32, i32) {
    %c0_i32 = arith.constant 0 : i32
    %c0_i32_0 = arith.constant 0 : i32
    %c0_i32_1 = arith.constant 0 : i32
    return %c0_i32, %c0_i32_0 : i32, i32
  }
  func.func @transform_3(%arg0: i32) -> (i32, i32) {
    %c0_i32 = arith.constant 0 : i32
    %c0_i32_0 = arith.constant 0 : i32
    %c0_i32_1 = arith.constant 0 : i32
    return %c0_i32, %c0_i32_0 : i32, i32
  }
  func.func @transform_4(%arg0: i32) -> (i32, i32) {
    %c0_i32 = arith.constant 0 : i32
    %c0_i32_0 = arith.constant 0 : i32
    %c0_i32_1 = arith.constant 0 : i32
    return %c0_i32, %c0_i32_0 : i32, i32
  }
  func.func @transform_5(%arg0: i32) -> (i32, i32) {
    %c0_i32 = arith.constant 0 : i32
    %c0_i32_0 = arith.constant 0 : i32
    %c0_i32_1 = arith.constant 0 : i32
    return %c0_i32, %c0_i32_0 : i32, i32
  }
  func.func @transform_6(%arg0: i32) -> (i32, i32) {
    %c0_i32 = arith.constant 0 : i32
    %c0_i32_0 = arith.constant 0 : i32
    %c0_i32_1 = arith.constant 0 : i32
    return %c0_i32, %c0_i32_0 : i32, i32
  }
  func.func @transform_7(%arg0: i32) -> (i32, i32) {
    %c0_i32 = arith.constant 0 : i32
    %c0_i32_0 = arith.constant 0 : i32
    return %arg0, %c0_i32 : i32, i32
  }
}

</mosaic_0001>

<llo_original>
// kernel: tpu_custom_call.1
$region0: #{tpu_custom_call.1}
  #allocation0 [shape = 'u32[]', space=smem, size = 0x4, offset = 0x4, fixed_abs, tag = 'smem constant byte address 0x4 - core index']
  #allocation1 [shape = 'u32[144,128]{1,0:T(1,128)}', space=vmem, size = 0x12000, scoped, tag = 'internal scratch']
  #allocation2 [shape = 'f32[1,1]{1,0:T(1,128)S(1)}', space=vmem, size = 0x200, scoped, tag = 'scoped memory for tpu_custom_call.1']
  %s0 = inlined_call_operand.hbm [shape: f32[8,784], index: 0, kind: input, shape index: {}]
  %s1 = inlined_call_operand.hbm [shape: bf16[784,256], index: 1, kind: input, shape index: {}]
  %s2 = inlined_call_operand.vmem [shape: f32[1,256], index: 2, kind: input, shape index: {}]
  %s3 = inlined_call_operand.hbm [shape: bf16[256,256], index: 3, kind: input, shape index: {}]
  %s4 = inlined_call_operand.vmem [shape: f32[1,256], index: 4, kind: input, shape index: {}]
  %s5 = inlined_call_operand.vmem [shape: f32[1,256], index: 5, kind: input, shape index: {}]
  %s6 = inlined_call_operand.<no memory space> [shape: f32[1,1], index: 6, kind: input, shape index: {}]
  %s7 = inlined_call_operand.vmem [shape: f32[8,1], index: 7, kind: output, shape index: {}]
  %s8 = sld [smem:[#allocation0]]
  $region50: #{tpu_custom_call.1} parent=0
    _
  %s10 = ssub.s32 1, %s8
  %s11 = scalar_select 0, %s10, %s8
  %v12 = vstv %s6
  %13 = vst [vmem:[#allocation2] sm:$0x1] %v12
  $region1: #{tpu_custom_call.1} parent=0
    #allocation3 [shape = 'u8[28672]{0}', space=vmem, size = 0x7000, scoped, tag = 'input window, operand 0, single buffered']
    #allocation4 [shape = 's32[1]{0}', space=sflag, size = 0x4, scoped, tag = 'scoped memory for tpu_custom_call.1']
    #allocation5 [shape = 'u8[401408]{0}', space=vmem, size = 0x62000, scoped, tag = 'input window, operand 1, single buffered']
    #allocation6 [shape = 's32[1]{0}', space=sflag, size = 0x4, scoped, tag = 'scoped memory for tpu_custom_call.1']
    #allocation7 [shape = 'u8[131072]{0}', space=vmem, size = 0x20000, scoped, tag = 'input window, operand 3, single buffered']
    %14 = vsyncpa [#allocation4], 0
    %15 = vsyncpa [#allocation6], 0
    // Predicated region
    $region2: #{tpu_custom_call.1} parent=1 // pred_check
      _
    $region3: #{tpu_custom_call.1} parent=1 // pred_check_branch
      %17 = sbr.rel (0) target = $region5
    $region4: #{tpu_custom_call.1} parent=1 // pred_region
      %s19 = ssub.s32 896, 896
      %20 = vsyncadd [#allocation4], %s19
      %s22 = sshll.u32 [#allocation3], 4
      %s23 = int_to_ptr.vmem [resolvable:$true] %s22
      %25 = dma.hbm_to_vmem [thread:$0]  %s0, 896, %s23, [#allocation4]
    $region5: #{tpu_custom_call.1} parent=1 // pred_fallthru
      _
    // Predicated region
    $region6: #{tpu_custom_call.1} parent=1 // pred_check
      _
    $region7: #{tpu_custom_call.1} parent=1 // pred_check_branch
      %27 = sbr.rel (0) target = $region9
    $region8: #{tpu_custom_call.1} parent=1 // pred_region
      %s29 = ssub.s32 12544, 12544
      %30 = vsyncadd [#allocation6], %s29
      %s31 = sshll.u32 [#allocation5], 4
      %s32 = int_to_ptr.vmem [resolvable:$true] %s31
      %37 = dma.hbm_to_vmem [thread:$0]  %s1, 12544, %s32, [#allocation6], 128, 128, 8
    $region9: #{tpu_custom_call.1} parent=1 // pred_fallthru
      _
    // Predicated region
    $region10: #{tpu_custom_call.1} parent=1 // pred_check
      _
    $region11: #{tpu_custom_call.1} parent=1 // pred_check_branch
      %39 = sbr.rel (0) target = $region13
    $region12: #{tpu_custom_call.1} parent=1 // pred_region
      _
    $region13: #{tpu_custom_call.1} parent=1 // pred_fallthru
      _
    // Predicated region
    $region14: #{tpu_custom_call.1} parent=1 // pred_check
      _
    $region15: #{tpu_custom_call.1} parent=1 // pred_check_branch
      %41 = sbr.rel (0) target = $region17
    $region16: #{tpu_custom_call.1} parent=1 // pred_region
      %s43 = ssub.s32 4096, 4096
      %44 = vsyncadd [#allocation6], %s43
      %s45 = sshll.u32 [#allocation7], 4
      %s46 = int_to_ptr.vmem [resolvable:$true] %s45
      %51 = dma.hbm_to_vmem [thread:$0]  %s3, 4096, %s46, [#allocation6], 128, 128, 8
    $region17: #{tpu_custom_call.1} parent=1 // pred_fallthru
      _
    // Predicated region
    $region18: #{tpu_custom_call.1} parent=1 // pred_check
      _
    $region19: #{tpu_custom_call.1} parent=1 // pred_check_branch
      %53 = sbr.rel (0) target = $region21
    $region20: #{tpu_custom_call.1} parent=1 // pred_region
      _
    $region21: #{tpu_custom_call.1} parent=1 // pred_fallthru
      _
    // Predicated region
    $region22: #{tpu_custom_call.1} parent=1 // pred_check
      _
    $region23: #{tpu_custom_call.1} parent=1 // pred_check_branch
      %55 = sbr.rel (0) target = $region25
    $region24: #{tpu_custom_call.1} parent=1 // pred_region
      _
    $region25: #{tpu_custom_call.1} parent=1 // pred_fallthru
      _
    // Predicated region
    $region26: #{tpu_custom_call.1} parent=1 // pred_check
      _
    $region27: #{tpu_custom_call.1} parent=1 // pred_check_branch
      %57 = sbr.rel (0) target = $region29
    $region28: #{tpu_custom_call.1} parent=1 // pred_region
      _
    $region29: #{tpu_custom_call.1} parent=1 // pred_fallthru
      _
    // Predicated region
    $region30: #{tpu_custom_call.1} parent=1 // pred_check
      _
    $region31: #{tpu_custom_call.1} parent=1 // pred_check_branch
      %59 = sbr.rel (0) target = $region33
    $region32: #{tpu_custom_call.1} parent=1 // pred_region
      %60 = dma.done [#allocation4], 896
    $region33: #{tpu_custom_call.1} parent=1 // pred_fallthru
      _
    // Predicated region
    $region34: #{tpu_custom_call.1} parent=1 // pred_check
      _
    $region35: #{tpu_custom_call.1} parent=1 // pred_check_branch
      %62 = sbr.rel (0) target = $region37
    $region36: #{tpu_custom_call.1} parent=1 // pred_region
      %63 = dma.done [#allocation6], 12544
    $region37: #{tpu_custom_call.1} parent=1 // pred_fallthru
      _
    // Predicated region
    $region38: #{tpu_custom_call.1} parent=1 // pred_check
      _
    $region39: #{tpu_custom_call.1} parent=1 // pred_check_branch
      %65 = sbr.rel (0) target = $region41
    $region40: #{tpu_custom_call.1} parent=1 // pred_region
      %66 = dma.done [#allocation6], 4096
    $region41: #{tpu_custom_call.1} parent=1 // pred_fallthru
      _
    %v68 = vld [vmem:[#allocation3] sm:$0xff]
    %v69 = vld [vmem:[#allocation3 + $0x8] sm:$0xff]
    %v70 = vld [vmem:[#allocation3 + $0x10] sm:$0xff]
    %v71 = vld [vmem:[#allocation3 + $0x18] sm:$0xff]
    %v72 = vld [vmem:[#allocation3 + $0x20] sm:$0xff]
    %v73 = vld [vmem:[#allocation3 + $0x28] sm:$0xff]
    %v74 = vld [vmem:[#allocation3 + $0x30] sm:$0xff]
    %v75 = vpack.c.bf16 %v68, %v68
    %v76 = vpack.c.bf16 %v69, %v69
    %v77 = vpack.c.bf16 %v70, %v70
    %v78 = vpack.c.bf16 %v71, %v71
    %v79 = vpack.c.bf16 %v72, %v72
    %v80 = vpack.c.bf16 %v73, %v73
    %v81 = vpack.c.bf16 %v74, %v74
    %v82 = vld [vmem:[#allocation5] sm:$0xff]
    %v83 = vld [vmem:[#allocation5 + $0x8] sm:$0xff]
    %v84 = vld [vmem:[#allocation5 + $0x10] sm:$0xff]
    %v85 = vld [vmem:[#allocation5 + $0x18] sm:$0xff]
    %v86 = vld [vmem:[#allocation5 + $0x20] sm:$0xff]
    %v87 = vld [vmem:[#allocation5 + $0x28] sm:$0xff]
    %v88 = vld [vmem:[#allocation5 + $0x30] sm:$0xff]
    %v89 = vld [vmem:[#allocation5 + $0x38] sm:$0xff]
    %v90 = vld [vmem:[#allocation5 + $0x40] sm:$0xff]
    %v91 = vld [vmem:[#allocation5 + $0x48] sm:$0xff]
    %v92 = vld [vmem:[#allocation5 + $0x50] sm:$0xff]
    %v93 = vld [vmem:[#allocation5 + $0x58] sm:$0xff]
    %v94 = vld [vmem:[#allocation5 + $0x60] sm:$0xff]
    %v95 = vld [vmem:[#allocation5 + $0x68] sm:$0xff]
    %v96 = vld [vmem:[#allocation5 + $0x70] sm:$0xff]
    %v97 = vld [vmem:[#allocation5 + $0x78] sm:$0xff]
    %v98 = vld [vmem:[#allocation5 + $0x80] sm:$0xff]
    %v99 = vld [vmem:[#allocation5 + $0x88] sm:$0xff]
    %v100 = vld [vmem:[#allocation5 + $0x90] sm:$0xff]
    %v101 = vld [vmem:[#allocation5 + $0x98] sm:$0xff]
    %v102 = vld [vmem:[#allocation5 + $0xa0] sm:$0xff]
    %v103 = vld [vmem:[#allocation5 + $0xa8] sm:$0xff]
    %v104 = vld [vmem:[#allocation5 + $0xb0] sm:$0xff]
    %v105 = vld [vmem:[#allocation5 + $0xb8] sm:$0xff]
    %v106 = vld [vmem:[#allocation5 + $0xc0] sm:$0xff]
    %v107 = vld [vmem:[#allocation5 + $0xc8] sm:$0xff]
    %v108 = vld [vmem:[#allocation5 + $0xd0] sm:$0xff]
    %v109 = vld [vmem:[#allocation5 + $0xd8] sm:$0xff]
    %v110 = vld [vmem:[#allocation5 + $0xe0] sm:$0xff]
    %v111 = vld [vmem:[#allocation5 + $0xe8] sm:$0xff]
    %v112 = vld [vmem:[#allocation5 + $0xf0] sm:$0xff]
    %v113 = vld [vmem:[#allocation5 + $0xf8] sm:$0xff]
    %v114 = vld [vmem:[#allocation5 + $0x100] sm:$0xff]
    %v115 = vld [vmem:[#allocation5 + $0x108] sm:$0xff]
    %v116 = vld [vmem:[#allocation5 + $0x110] sm:$0xff]
    %v117 = vld [vmem:[#allocation5 + $0x118] sm:$0xff]
    %v118 = vld [vmem:[#allocation5 + $0x120] sm:$0xff]
    %v119 = vld [vmem:[#allocation5 + $0x128] sm:$0xff]
    %v120 = vld [vmem:[#allocation5 + $0x130] sm:$0xff]
    %v121 = vld [vmem:[#allocation5 + $0x138] sm:$0xff]
    %v122 = vld [vmem:[#allocation5 + $0x140] sm:$0xff]
    %v123 = vld [vmem:[#allocation5 + $0x148] sm:$0xff]
    %v124 = vld [vmem:[#allocation5 + $0x150] sm:$0xff]
    %v125 = vld [vmem:[#allocation5 + $0x158] sm:$0xff]
    %v126 = vld [vmem:[#allocation5 + $0x160] sm:$0xff]
    %v127 = vld [vmem:[#allocation5 + $0x168] sm:$0xff]
    %v128 = vld [vmem:[#allocation5 + $0x170] sm:$0xff]
    %v129 = vld [vmem:[#allocation5 + $0x178] sm:$0xff]
    %v130 = vld [vmem:[#allocation5 + $0x180] sm:$0xff]
    %v131 = vld [vmem:[#allocation5 + $0x188] sm:$0xff]
    %v132 = vld [vmem:[#allocation5 + $0x190] sm:$0xff]
    %v133 = vld [vmem:[#allocation5 + $0x198] sm:$0xff]
    %v134 = vld [vmem:[#allocation5 + $0x1a0] sm:$0xff]
    %v135 = vld [vmem:[#allocation5 + $0x1a8] sm:$0xff]
    %v136 = vld [vmem:[#allocation5 + $0x1b0] sm:$0xff]
    %v137 = vld [vmem:[#allocation5 + $0x1b8] sm:$0xff]
    %v138 = vld [vmem:[#allocation5 + $0x1c0] sm:$0xff]
    %v139 = vld [vmem:[#allocation5 + $0x1c8] sm:$0xff]
    %v140 = vld [vmem:[#allocation5 + $0x1d0] sm:$0xff]
    %v141 = vld [vmem:[#allocation5 + $0x1d8] sm:$0xff]
    %v142 = vld [vmem:[#allocation5 + $0x1e0] sm:$0xff]
    %v143 = vld [vmem:[#allocation5 + $0x1e8] sm:$0xff]
    %v144 = vld [vmem:[#allocation5 + $0x1f0] sm:$0xff]
    %v145 = vld [vmem:[#allocation5 + $0x1f8] sm:$0xff]
    %v146 = vld [vmem:[#allocation5 + $0x200] sm:$0xff]
    %v147 = vld [vmem:[#allocation5 + $0x208] sm:$0xff]
    %v148 = vld [vmem:[#allocation5 + $0x210] sm:$0xff]
    %v149 = vld [vmem:[#allocation5 + $0x218] sm:$0xff]
    %v150 = vld [vmem:[#allocation5 + $0x220] sm:$0xff]
    %v151 = vld [vmem:[#allocation5 + $0x228] sm:$0xff]
    %v152 = vld [vmem:[#allocation5 + $0x230] sm:$0xff]
    %v153 = vld [vmem:[#allocation5 + $0x238] sm:$0xff]
    %v154 = vld [vmem:[#allocation5 + $0x240] sm:$0xff]
    %v155 = vld [vmem:[#allocation5 + $0x248] sm:$0xff]
    %v156 = vld [vmem:[#allocation5 + $0x250] sm:$0xff]
    %v157 = vld [vmem:[#allocation5 + $0x258] sm:$0xff]
    %v158 = vld [vmem:[#allocation5 + $0x260] sm:$0xff]
    %v159 = vld [vmem:[#allocation5 + $0x268] sm:$0xff]
    %v160 = vld [vmem:[#allocation5 + $0x270] sm:$0xff]
    %v161 = vld [vmem:[#allocation5 + $0x278] sm:$0xff]
    %v162 = vld [vmem:[#allocation5 + $0x280] sm:$0xff]
    %v163 = vld [vmem:[#allocation5 + $0x288] sm:$0xff]
    %v164 = vld [vmem:[#allocation5 + $0x290] sm:$0xff]
    %v165 = vld [vmem:[#allocation5 + $0x298] sm:$0xff]
    %v166 = vld [vmem:[#allocation5 + $0x2a0] sm:$0xff]
    %v167 = vld [vmem:[#allocation5 + $0x2a8] sm:$0xff]
    %v168 = vld [vmem:[#allocation5 + $0x2b0] sm:$0xff]
    %v169 = vld [vmem:[#allocation5 + $0x2b8] sm:$0xff]
    %v170 = vld [vmem:[#allocation5 + $0x2c0] sm:$0xff]
    %v171 = vld [vmem:[#allocation5 + $0x2c8] sm:$0xff]
    %v172 = vld [vmem:[#allocation5 + $0x2d0] sm:$0xff]
    %v173 = vld [vmem:[#allocation5 + $0x2d8] sm:$0xff]
    %v174 = vld [vmem:[#allocation5 + $0x2e0] sm:$0xff]
    %v175 = vld [vmem:[#allocation5 + $0x2e8] sm:$0xff]
    %v176 = vld [vmem:[#allocation5 + $0x2f0] sm:$0xff]
    %v177 = vld [vmem:[#allocation5 + $0x2f8] sm:$0xff]
    %v178 = vld [vmem:[#allocation5 + $0x300] sm:$0xff]
    %v179 = vld [vmem:[#allocation5 + $0x308] sm:$0xff]
    %v180 = vld [vmem:[%s2] sm:$0x3]
    %v182 = vlaneseq
    %v183 = vshrl.u32 %v182, 7
    %v184 = vsub.s32 0, %v183
    %v185 = vrot.slane %v180, %v184
    %v186 = vlaneseq
    %v187 = vshrl.u32 %v186, 7
    %v188 = vsub.s32 1, %v187
    %v189 = vrot.slane %v180, %v188
    %v290 = vunpack.c.l.b16 %v82
    %v291 = vunpack.c.h.b16 %v82
    %v292 = vunpack.c.l.b16 %v83
    %v293 = vunpack.c.h.b16 %v83
    %v294 = vunpack.c.l.b16 %v84
    %v295 = vunpack.c.h.b16 %v84
    %v296 = vunpack.c.l.b16 %v85
    %v297 = vunpack.c.h.b16 %v85
    %v298 = vunpack.c.l.b16 %v86
    %v299 = vunpack.c.h.b16 %v86
    %v300 = vunpack.c.l.b16 %v87
    %v301 = vunpack.c.h.b16 %v87
    %v302 = vunpack.c.l.b16 %v88
    %v303 = vunpack.c.h.b16 %v88
    %v304 = vunpack.c.l.b16 %v89
    %v305 = vunpack.c.h.b16 %v89
    %v306 = vunpack.c.l.b16 %v90
    %v307 = vunpack.c.h.b16 %v90
    %v308 = vunpack.c.l.b16 %v91
    %v309 = vunpack.c.h.b16 %v91
    %v310 = vunpack.c.l.b16 %v92
    %v311 = vunpack.c.h.b16 %v92
    %v312 = vunpack.c.l.b16 %v93
    %v313 = vunpack.c.h.b16 %v93
    %v314 = vunpack.c.l.b16 %v94
    %v315 = vunpack.c.h.b16 %v94
    %v316 = vunpack.c.l.b16 %v95
    %v317 = vunpack.c.h.b16 %v95
    %v318 = vunpack.c.l.b16 %v96
    %v319 = vunpack.c.h.b16 %v96
    %v320 = vunpack.c.l.b16 %v97
    %v321 = vunpack.c.h.b16 %v97
    %v322 = vunpack.c.l.b16 %v98
    %v323 = vunpack.c.h.b16 %v98
    %v324 = vunpack.c.l.b16 %v99
    %v325 = vunpack.c.h.b16 %v99
    %v326 = vunpack.c.l.b16 %v100
    %v327 = vunpack.c.h.b16 %v100
    %v328 = vunpack.c.l.b16 %v101
    %v329 = vunpack.c.h.b16 %v101
    %v330 = vunpack.c.l.b16 %v102
    %v331 = vunpack.c.h.b16 %v102
    %v332 = vunpack.c.l.b16 %v103
    %v333 = vunpack.c.h.b16 %v103
    %v334 = vunpack.c.l.b16 %v104
    %v335 = vunpack.c.h.b16 %v104
    %v336 = vunpack.c.l.b16 %v105
    %v337 = vunpack.c.h.b16 %v105
    %v338 = vunpack.c.l.b16 %v106
    %v339 = vunpack.c.h.b16 %v106
    %v340 = vunpack.c.l.b16 %v107
    %v341 = vunpack.c.h.b16 %v107
    %v342 = vunpack.c.l.b16 %v108
    %v343 = vunpack.c.h.b16 %v108
    %v344 = vunpack.c.l.b16 %v109
    %v345 = vunpack.c.h.b16 %v109
    %v346 = vunpack.c.l.b16 %v110
    %v347 = vunpack.c.h.b16 %v110
    %v348 = vunpack.c.l.b16 %v111
    %v349 = vunpack.c.h.b16 %v111
    %v350 = vunpack.c.l.b16 %v112
    %v351 = vunpack.c.h.b16 %v112
    %v352 = vunpack.c.l.b16 %v113
    %v353 = vunpack.c.h.b16 %v113
    %v354 = vunpack.c.l.b16 %v114
    %v355 = vunpack.c.h.b16 %v114
    %v356 = vunpack.c.l.b16 %v115
    %v357 = vunpack.c.h.b16 %v115
    %v358 = vunpack.c.l.b16 %v116
    %v359 = vunpack.c.h.b16 %v116
    %v360 = vunpack.c.l.b16 %v117
    %v361 = vunpack.c.h.b16 %v117
    %v362 = vunpack.c.l.b16 %v118
    %v363 = vunpack.c.h.b16 %v118
    %v364 = vunpack.c.l.b16 %v119
    %v365 = vunpack.c.h.b16 %v119
    %v366 = vunpack.c.l.b16 %v120
    %v367 = vunpack.c.h.b16 %v120
    %v368 = vunpack.c.l.b16 %v121
    %v369 = vunpack.c.h.b16 %v121
    %v370 = vunpack.c.l.b16 %v122
    %v371 = vunpack.c.h.b16 %v122
    %v372 = vunpack.c.l.b16 %v123
    %v373 = vunpack.c.h.b16 %v123
    %v374 = vunpack.c.l.b16 %v124
    %v375 = vunpack.c.h.b16 %v124
    %v376 = vunpack.c.l.b16 %v125
    %v377 = vunpack.c.h.b16 %v125
    %v378 = vunpack.c.l.b16 %v126
    %v379 = vunpack.c.h.b16 %v126
    %v380 = vunpack.c.l.b16 %v127
    %v381 = vunpack.c.h.b16 %v127
    %v382 = vunpack.c.l.b16 %v128
    %v383 = vunpack.c.h.b16 %v128
    %v384 = vunpack.c.l.b16 %v129
    %v385 = vunpack.c.h.b16 %v129
    %v386 = vunpack.c.l.b16 %v130
    %v387 = vunpack.c.h.b16 %v130
    %v388 = vunpack.c.l.b16 %v131
    %v389 = vunpack.c.h.b16 %v131
    %v390 = vunpack.c.l.b16 %v132
    %v391 = vunpack.c.h.b16 %v132
    %v392 = vunpack.c.l.b16 %v133
    %v393 = vunpack.c.h.b16 %v133
    %v394 = vunpack.c.l.b16 %v134
    %v395 = vunpack.c.h.b16 %v134
    %v396 = vunpack.c.l.b16 %v135
    %v397 = vunpack.c.h.b16 %v135
    %v398 = vunpack.c.l.b16 %v136
    %v399 = vunpack.c.h.b16 %v136
    %v400 = vunpack.c.l.b16 %v137
    %v401 = vunpack.c.h.b16 %v137
    %v402 = vunpack.c.l.b16 %v138
    %v403 = vunpack.c.h.b16 %v138
    %v404 = vunpack.c.l.b16 %v139
    %v405 = vunpack.c.h.b16 %v139
    %v406 = vunpack.c.l.b16 %v140
    %v407 = vunpack.c.h.b16 %v140
    %v408 = vunpack.c.l.b16 %v141
    %v409 = vunpack.c.h.b16 %v141
    %v410 = vunpack.c.l.b16 %v142
    %v411 = vunpack.c.h.b16 %v142
    %v412 = vunpack.c.l.b16 %v143
    %v413 = vunpack.c.h.b16 %v143
    %v414 = vunpack.c.l.b16 %v144
    %v415 = vunpack.c.h.b16 %v144
    %v416 = vunpack.c.l.b16 %v145
    %v417 = vunpack.c.h.b16 %v145
    %v418 = vunpack.c.l.b16 %v146
    %v419 = vunpack.c.h.b16 %v146
    %v420 = vunpack.c.l.b16 %v147
    %v421 = vunpack.c.h.b16 %v147
    %v422 = vunpack.c.l.b16 %v148
    %v423 = vunpack.c.h.b16 %v148
    %v424 = vunpack.c.l.b16 %v149
    %v425 = vunpack.c.h.b16 %v149
    %v426 = vunpack.c.l.b16 %v150
    %v427 = vunpack.c.h.b16 %v150
    %v428 = vunpack.c.l.b16 %v151
    %v429 = vunpack.c.h.b16 %v151
    %v430 = vunpack.c.l.b16 %v152
    %v431 = vunpack.c.h.b16 %v152
    %v432 = vunpack.c.l.b16 %v153
    %v433 = vunpack.c.h.b16 %v153
    %v434 = vunpack.c.l.b16 %v154
    %v435 = vunpack.c.h.b16 %v154
    %v436 = vunpack.c.l.b16 %v155
    %v437 = vunpack.c.h.b16 %v155
    %v438 = vunpack.c.l.b16 %v156
    %v439 = vunpack.c.h.b16 %v156
    %v440 = vunpack.c.l.b16 %v157
    %v441 = vunpack.c.h.b16 %v157
    %v442 = vunpack.c.l.b16 %v158
    %v443 = vunpack.c.h.b16 %v158
    %v444 = vunpack.c.l.b16 %v159
    %v445 = vunpack.c.h.b16 %v159
    %v446 = vunpack.c.l.b16 %v160
    %v447 = vunpack.c.h.b16 %v160
    %v448 = vunpack.c.l.b16 %v161
    %v449 = vunpack.c.h.b16 %v161
    %v450 = vunpack.c.l.b16 %v162
    %v451 = vunpack.c.h.b16 %v162
    %v452 = vunpack.c.l.b16 %v163
    %v453 = vunpack.c.h.b16 %v163
    %v454 = vunpack.c.l.b16 %v164
    %v455 = vunpack.c.h.b16 %v164
    %v456 = vunpack.c.l.b16 %v165
    %v457 = vunpack.c.h.b16 %v165
    %v458 = vunpack.c.l.b16 %v166
    %v459 = vunpack.c.h.b16 %v166
    %v460 = vunpack.c.l.b16 %v167
    %v461 = vunpack.c.h.b16 %v167
    %v462 = vunpack.c.l.b16 %v168
    %v463 = vunpack.c.h.b16 %v168
    %v464 = vunpack.c.l.b16 %v169
    %v465 = vunpack.c.h.b16 %v169
    %v466 = vunpack.c.l.b16 %v170
    %v467 = vunpack.c.h.b16 %v170
    %v468 = vunpack.c.l.b16 %v171
    %v469 = vunpack.c.h.b16 %v171
    %v470 = vunpack.c.l.b16 %v172
    %v471 = vunpack.c.h.b16 %v172
    %v472 = vunpack.c.l.b16 %v173
    %v473 = vunpack.c.h.b16 %v173
    %v474 = vunpack.c.l.b16 %v174
    %v475 = vunpack.c.h.b16 %v174
    %v476 = vunpack.c.l.b16 %v175
    %v477 = vunpack.c.h.b16 %v175
    %v478 = vunpack.c.l.b16 %v176
    %v479 = vunpack.c.h.b16 %v176
    %v480 = vunpack.c.l.b16 %v177
    %v481 = vunpack.c.h.b16 %v177
    %v482 = vunpack.c.l.b16 %v178
    %v483 = vunpack.c.h.b16 %v178
    %v484 = vunpack.c.l.b16 %v179
    %v485 = vunpack.c.h.b16 %v179
    %v486 = vpack.c.b16 %v292, %v290
    %v487 = vpack.c.b16 %v293, %v291
    %v488 = vpack.c.b16 %v296, %v294
    %v489 = vpack.c.b16 %v297, %v295
    %v490 = vpack.c.b16 %v300, %v298
    %v491 = vpack.c.b16 %v301, %v299
    %v492 = vpack.c.b16 %v304, %v302
    %v493 = vpack.c.b16 %v305, %v303
    %v494 = vpack.c.b16 %v308, %v306
    %v495 = vpack.c.b16 %v309, %v307
    %v496 = vpack.c.b16 %v312, %v310
    %v497 = vpack.c.b16 %v313, %v311
    %v498 = vpack.c.b16 %v316, %v314
    %v499 = vpack.c.b16 %v317, %v315
    %v500 = vpack.c.b16 %v320, %v318
    %v501 = vpack.c.b16 %v321, %v319
    %v502 = vpack.c.b16 %v324, %v322
    %v503 = vpack.c.b16 %v325, %v323
    %v504 = vpack.c.b16 %v328, %v326
    %v505 = vpack.c.b16 %v329, %v327
    %v506 = vpack.c.b16 %v332, %v330
    %v507 = vpack.c.b16 %v333, %v331
    %v508 = vpack.c.b16 %v336, %v334
    %v509 = vpack.c.b16 %v337, %v335
    %v510 = vpack.c.b16 %v340, %v338
    %v511 = vpack.c.b16 %v341, %v339
    %v512 = vpack.c.b16 %v344, %v342
    %v513 = vpack.c.b16 %v345, %v343
    %v514 = vpack.c.b16 %v348, %v346
    %v515 = vpack.c.b16 %v349, %v347
    %v516 = vpack.c.b16 %v352, %v350
    %v517 = vpack.c.b16 %v353, %v351
    %v518 = vpack.c.b16 %v356, %v354
    %v519 = vpack.c.b16 %v357, %v355
    %v520 = vpack.c.b16 %v360, %v358
    %v521 = vpack.c.b16 %v361, %v359
    %v522 = vpack.c.b16 %v364, %v362
    %v523 = vpack.c.b16 %v365, %v363
    %v524 = vpack.c.b16 %v368, %v366
    %v525 = vpack.c.b16 %v369, %v367
    %v526 = vpack.c.b16 %v372, %v370
    %v527 = vpack.c.b16 %v373, %v371
    %v528 = vpack.c.b16 %v376, %v374
    %v529 = vpack.c.b16 %v377, %v375
    %v530 = vpack.c.b16 %v380, %v378
    %v531 = vpack.c.b16 %v381, %v379
    %v532 = vpack.c.b16 %v384, %v382
    %v533 = vpack.c.b16 %v385, %v383
    %v534 = vpack.c.b16 %v388, %v386
    %v535 = vpack.c.b16 %v389, %v387
    %v536 = vpack.c.b16 %v392, %v390
    %v537 = vpack.c.b16 %v393, %v391
    %v538 = vpack.c.b16 %v396, %v394
    %v539 = vpack.c.b16 %v397, %v395
    %v540 = vpack.c.b16 %v400, %v398
    %v541 = vpack.c.b16 %v401, %v399
    %v542 = vpack.c.b16 %v404, %v402
    %v543 = vpack.c.b16 %v405, %v403
    %v544 = vpack.c.b16 %v408, %v406
    %v545 = vpack.c.b16 %v409, %v407
    %v546 = vpack.c.b16 %v412, %v410
    %v547 = vpack.c.b16 %v413, %v411
    %v548 = vpack.c.b16 %v416, %v414
    %v549 = vpack.c.b16 %v417, %v415
    %v550 = vpack.c.b16 %v420, %v418
    %v551 = vpack.c.b16 %v421, %v419
    %v552 = vpack.c.b16 %v424, %v422
    %v553 = vpack.c.b16 %v425, %v423
    %v554 = vpack.c.b16 %v428, %v426
    %v555 = vpack.c.b16 %v429, %v427
    %v556 = vpack.c.b16 %v432, %v430
    %v557 = vpack.c.b16 %v433, %v431
    %v558 = vpack.c.b16 %v436, %v434
    %v559 = vpack.c.b16 %v437, %v435
    %v560 = vpack.c.b16 %v440, %v438
    %v561 = vpack.c.b16 %v441, %v439
    %v562 = vpack.c.b16 %v444, %v442
    %v563 = vpack.c.b16 %v445, %v443
    %v564 = vpack.c.b16 %v448, %v446
    %v565 = vpack.c.b16 %v449, %v447
    %v566 = vpack.c.b16 %v452, %v450
    %v567 = vpack.c.b16 %v453, %v451
    %v568 = vpack.c.b16 %v456, %v454
    %v569 = vpack.c.b16 %v457, %v455
    %v570 = vpack.c.b16 %v460, %v458
    %v571 = vpack.c.b16 %v461, %v459
    %v572 = vpack.c.b16 %v464, %v462
    %v573 = vpack.c.b16 %v465, %v463
    %v574 = vpack.c.b16 %v468, %v466
    %v575 = vpack.c.b16 %v469, %v467
    %v576 = vpack.c.b16 %v472, %v470
    %v577 = vpack.c.b16 %v473, %v471
    %v578 = vpack.c.b16 %v476, %v474
    %v579 = vpack.c.b16 %v477, %v475
    %v580 = vpack.c.b16 %v480, %v478
    %v581 = vpack.c.b16 %v481, %v479
    %v582 = vpack.c.b16 %v484, %v482
    %v583 = vpack.c.b16 %v485, %v483
    %vm682 = vcmask 130048
    %v684 = vsel %vm682, %v81, 0
    %686 = vmatprep.subr.bf16.mxu0 %v487
    %687 = vmatpush1.bf16.msra.mxu0 %v486
    %688 = vmatprep.subr.bf16.mxu0 %v489
    %689 = vmatpush1.bf16.msra.mxu0 %v488
    %690 = vmatprep.subr.bf16.mxu0 %v491
    %691 = vmatpush1.bf16.msra.mxu0 %v490
    %692 = vmatprep.subr.bf16.mxu0 %v493
    %693 = vmatpush1.bf16.msra.mxu0 %v492
    %694 = vmatprep.subr.bf16.mxu0 %v495
    %695 = vmatpush1.bf16.msra.mxu0 %v494
    %696 = vmatprep.subr.bf16.mxu0 %v497
    %697 = vmatpush1.bf16.msra.mxu0 %v496
    %698 = vmatprep.subr.bf16.mxu0 %v499
    %699 = vmatpush1.bf16.msra.mxu0 %v498
    %700 = vmatprep.subr.bf16.mxu0 %v501
    %701 = vmatpush1.bf16.msra.mxu0 %v500
    %702 = vmatprep.subr.bf16.mxu0 %v503
    %703 = vmatpush1.bf16.msra.mxu0 %v502
    %704 = vmatprep.subr.bf16.mxu0 %v505
    %705 = vmatpush1.bf16.msra.mxu0 %v504
    %706 = vmatprep.subr.bf16.mxu0 %v507
    %707 = vmatpush1.bf16.msra.mxu0 %v506
    %708 = vmatprep.subr.bf16.mxu0 %v509
    %709 = vmatpush1.bf16.msra.mxu0 %v508
    %710 = vmatprep.subr.bf16.mxu0 %v511
    %711 = vmatpush1.bf16.msra.mxu0 %v510
    %712 = vmatprep.subr.bf16.mxu0 %v513
    %713 = vmatpush1.bf16.msra.mxu0 %v512
    %714 = vmatprep.subr.bf16.mxu0 %v515
    %715 = vmatpush1.bf16.msra.mxu0 %v514
    %716 = vmatprep.subr.bf16.mxu0 %v517
    %717 = vmatpush1.bf16.msra.mxu0 %v516
    %718 = vmatprep.mubr.bf16.mxu0 %v76
    %719 = vmatmul.mubr.bf16.gmra.mrb[0].mxu0 %v75
    %v720 = vpop.f32.mrb[0].mxu0
    %v721 = vadd.f32 %v185, %v720
    %v722 = vpop.f32.mrb[0].mxu0
    %v723 = vadd.f32 %v189, %v722
    %v724 = vpop.f32.mrb[0].mxu0
    %v725 = vpop.f32.mrb[0].mxu0
    %726 = vdwg.mxu0
    %727 = vmatprep.subr.bf16.mxu0 %v519
    %728 = vmatpush1.bf16.msra.mxu0 %v518
    %729 = vmatprep.subr.bf16.mxu0 %v521
    %730 = vmatpush1.bf16.msra.mxu0 %v520
    %731 = vmatprep.subr.bf16.mxu0 %v523
    %732 = vmatpush1.bf16.msra.mxu0 %v522
    %733 = vmatprep.subr.bf16.mxu0 %v525
    %734 = vmatpush1.bf16.msra.mxu0 %v524
    %735 = vmatprep.subr.bf16.mxu0 %v527
    %736 = vmatpush1.bf16.msra.mxu0 %v526
    %737 = vmatprep.subr.bf16.mxu0 %v529
    %738 = vmatpush1.bf16.msra.mxu0 %v528
    %739 = vmatprep.subr.bf16.mxu0 %v531
    %740 = vmatpush1.bf16.msra.mxu0 %v530
    %741 = vmatprep.subr.bf16.mxu0 %v533
    %742 = vmatpush1.bf16.msra.mxu0 %v532
    %743 = vmatprep.subr.bf16.mxu0 %v535
    %744 = vmatpush1.bf16.msra.mxu0 %v534
    %745 = vmatprep.subr.bf16.mxu0 %v537
    %746 = vmatpush1.bf16.msra.mxu0 %v536
    %747 = vmatprep.subr.bf16.mxu0 %v539
    %748 = vmatpush1.bf16.msra.mxu0 %v538
    %749 = vmatprep.subr.bf16.mxu0 %v541
    %750 = vmatpush1.bf16.msra.mxu0 %v540
    %751 = vmatprep.subr.bf16.mxu0 %v543
    %752 = vmatpush1.bf16.msra.mxu0 %v542
    %753 = vmatprep.subr.bf16.mxu0 %v545
    %754 = vmatpush1.bf16.msra.mxu0 %v544
    %755 = vmatprep.subr.bf16.mxu0 %v547
    %756 = vmatpush1.bf16.msra.mxu0 %v546
    %757 = vmatprep.subr.bf16.mxu0 %v549
    %758 = vmatpush1.bf16.msra.mxu0 %v548
    %759 = vmatprep.mubr.bf16.mxu0 %v78
    %760 = vmatmul.mubr.bf16.gmra.mrb[0].mxu0 %v77
    %v761 = vpop.f32.mrb[0].mxu0
    %v762 = vadd.f32 %v721, %v761
    %v763 = vpop.f32.mrb[0].mxu0
    %v764 = vadd.f32 %v723, %v763
    %v765 = vpop.f32.mrb[0].mxu0
    %v766 = vpop.f32.mrb[0].mxu0
    %767 = vdwg.mxu0
    %768 = vmatprep.subr.bf16.mxu0 %v551
    %769 = vmatpush1.bf16.msra.mxu0 %v550
    %770 = vmatprep.subr.bf16.mxu0 %v553
    %771 = vmatpush1.bf16.msra.mxu0 %v552
    %772 = vmatprep.subr.bf16.mxu0 %v555
    %773 = vmatpush1.bf16.msra.mxu0 %v554
    %774 = vmatprep.subr.bf16.mxu0 %v557
    %775 = vmatpush1.bf16.msra.mxu0 %v556
    %776 = vmatprep.subr.bf16.mxu0 %v559
    %777 = vmatpush1.bf16.msra.mxu0 %v558
    %778 = vmatprep.subr.bf16.mxu0 %v561
    %779 = vmatpush1.bf16.msra.mxu0 %v560
    %780 = vmatprep.subr.bf16.mxu0 %v563
    %781 = vmatpush1.bf16.msra.mxu0 %v562
    %782 = vmatprep.subr.bf16.mxu0 %v565
    %783 = vmatpush1.bf16.msra.mxu0 %v564
    %784 = vmatprep.subr.bf16.mxu0 %v567
    %785 = vmatpush1.bf16.msra.mxu0 %v566
    %786 = vmatprep.subr.bf16.mxu0 %v569
    %787 = vmatpush1.bf16.msra.mxu0 %v568
    %788 = vmatprep.subr.bf16.mxu0 %v571
    %789 = vmatpush1.bf16.msra.mxu0 %v570
    %790 = vmatprep.subr.bf16.mxu0 %v573
    %791 = vmatpush1.bf16.msra.mxu0 %v572
    %792 = vmatprep.subr.bf16.mxu0 %v575
    %793 = vmatpush1.bf16.msra.mxu0 %v574
    %794 = vmatprep.subr.bf16.mxu0 %v577
    %795 = vmatpush1.bf16.msra.mxu0 %v576
    %796 = vmatprep.subr.bf16.mxu0 %v579
    %797 = vmatpush1.bf16.msra.mxu0 %v578
    %798 = vmatprep.subr.bf16.mxu0 %v581
    %799 = vmatpush1.bf16.msra.mxu0 %v580
    %800 = vmatprep.mubr.bf16.mxu0 %v80
    %801 = vmatmul.mubr.bf16.gmra.mrb[0].mxu0 %v79
    %v802 = vpop.f32.mrb[0].mxu0
    %v803 = vadd.f32 %v762, %v802
    %v804 = vpop.f32.mrb[0].mxu0
    %v805 = vadd.f32 %v764, %v804
    %v806 = vpop.f32.mrb[0].mxu0
    %v807 = vpop.f32.mrb[0].mxu0
    %808 = vdwg.mxu0
    %809 = vmatprep.subr.bf16.mxu0 %v583
    %810 = vmatpush1.bf16.msra.mxu0 %v582
    %811 = vmatprep.subr.bf16.mxu0 0
    %812 = vmatpush1.bf16.msra.mxu0 0
    %813 = vmatprep.subr.bf16.mxu0 0
    %814 = vmatpush1.bf16.msra.mxu0 0
    %815 = vmatprep.subr.bf16.mxu0 0
    %816 = vmatpush1.bf16.msra.mxu0 0
    %817 = vmatprep.subr.bf16.mxu0 0
    %818 = vmatpush1.bf16.msra.mxu0 0
    %819 = vmatprep.subr.bf16.mxu0 0
    %820 = vmatpush1.bf16.msra.mxu0 0
    %821 = vmatprep.subr.bf16.mxu0 0
    %822 = vmatpush1.bf16.msra.mxu0 0
    %823 = vmatprep.subr.bf16.mxu0 0
    %824 = vmatpush1.bf16.msra.mxu0 0
    %825 = vmatprep.subr.bf16.mxu0 0
    %826 = vmatpush1.bf16.msra.mxu0 0
    %827 = vmatprep.subr.bf16.mxu0 0
    %828 = vmatpush1.bf16.msra.mxu0 0
    %829 = vmatprep.subr.bf16.mxu0 0
    %830 = vmatpush1.bf16.msra.mxu0 0
    %831 = vmatprep.subr.bf16.mxu0 0
    %832 = vmatpush1.bf16.msra.mxu0 0
    %833 = vmatprep.subr.bf16.mxu0 0
    %834 = vmatpush1.bf16.msra.mxu0 0
    %835 = vmatprep.subr.bf16.mxu0 0
    %836 = vmatpush1.bf16.msra.mxu0 0
    %837 = vmatprep.subr.bf16.mxu0 0
    %838 = vmatpush1.bf16.msra.mxu0 0
    %839 = vmatprep.subr.bf16.mxu0 0
    %840 = vmatpush1.bf16.msra.mxu0 0
    %841 = vmatprep.mubr.bf16.mxu0 0
    %842 = vmatmul.mubr.bf16.gmra.mrb[0].mxu0 %v684
    %v843 = vpop.f32.mrb[0].mxu0
    %v844 = vadd.f32 %v803, %v843
    %v845 = vpop.f32.mrb[0].mxu0
    %v846 = vadd.f32 %v805, %v845
    %v847 = vpop.f32.mrb[0].mxu0
    %v848 = vpop.f32.mrb[0].mxu0
    %849 = vdwg.mxu0
    %vm850 = vcmp.gt.f32.partialorder %v844, 0.0
    %vm851 = vcmp.gt.f32.partialorder %v846, 0.0
    %v852 = vmul.f32 %v844, 0.2
    %v853 = vmul.f32 %v846, 0.2
    %v854 = vsel %vm850, %v844, %v852
    %v855 = vsel %vm851, %v846, %v853
    %v856 = vpack.c.bf16 %v854, %v854
    %v857 = vpack.c.bf16 %v855, %v855
    %v858 = vld [vmem:[#allocation7] sm:$0xff]
    %v859 = vld [vmem:[#allocation7 + $0x8] sm:$0xff]
    %v860 = vld [vmem:[#allocation7 + $0x10] sm:$0xff]
    %v861 = vld [vmem:[#allocation7 + $0x18] sm:$0xff]
    %v862 = vld [vmem:[#allocation7 + $0x20] sm:$0xff]
    %v863 = vld [vmem:[#allocation7 + $0x28] sm:$0xff]
    %v864 = vld [vmem:[#allocation7 + $0x30] sm:$0xff]
    %v865 = vld [vmem:[#allocation7 + $0x38] sm:$0xff]
    %v866 = vld [vmem:[#allocation7 + $0x40] sm:$0xff]
    %v867 = vld [vmem:[#allocation7 + $0x48] sm:$0xff]
    %v868 = vld [vmem:[#allocation7 + $0x50] sm:$0xff]
    %v869 = vld [vmem:[#allocation7 + $0x58] sm:$0xff]
    %v870 = vld [vmem:[#allocation7 + $0x60] sm:$0xff]
    %v871 = vld [vmem:[#allocation7 + $0x68] sm:$0xff]
    %v872 = vld [vmem:[#allocation7 + $0x70] sm:$0xff]
    %v873 = vld [vmem:[#allocation7 + $0x78] sm:$0xff]
    %v874 = vld [vmem:[#allocation7 + $0x80] sm:$0xff]
    %v875 = vld [vmem:[#allocation7 + $0x88] sm:$0xff]
    %v876 = vld [vmem:[#allocation7 + $0x90] sm:$0xff]
    %v877 = vld [vmem:[#allocation7 + $0x98] sm:$0xff]
    %v878 = vld [vmem:[#allocation7 + $0xa0] sm:$0xff]
    %v879 = vld [vmem:[#allocation7 + $0xa8] sm:$0xff]
    %v880 = vld [vmem:[#allocation7 + $0xb0] sm:$0xff]
    %v881 = vld [vmem:[#allocation7 + $0xb8] sm:$0xff]
    %v882 = vld [vmem:[#allocation7 + $0xc0] sm:$0xff]
    %v883 = vld [vmem:[#allocation7 + $0xc8] sm:$0xff]
    %v884 = vld [vmem:[#allocation7 + $0xd0] sm:$0xff]
    %v885 = vld [vmem:[#allocation7 + $0xd8] sm:$0xff]
    %v886 = vld [vmem:[#allocation7 + $0xe0] sm:$0xff]
    %v887 = vld [vmem:[#allocation7 + $0xe8] sm:$0xff]
    %v888 = vld [vmem:[#allocation7 + $0xf0] sm:$0xff]
    %v889 = vld [vmem:[#allocation7 + $0xf8] sm:$0xff]
    %v890 = vld [vmem:[%s4] sm:$0x3]
    %v892 = vlaneseq
    %v893 = vshrl.u32 %v892, 7
    %v894 = vsub.s32 0, %v893
    %v895 = vrot.slane %v890, %v894
    %v896 = vlaneseq
    %v897 = vshrl.u32 %v896, 7
    %v898 = vsub.s32 1, %v897
    %v899 = vrot.slane %v890, %v898
    %v934 = vunpack.c.l.b16 %v858
    %v935 = vunpack.c.h.b16 %v858
    %v936 = vunpack.c.l.b16 %v859
    %v937 = vunpack.c.h.b16 %v859
    %v938 = vunpack.c.l.b16 %v860
    %v939 = vunpack.c.h.b16 %v860
    %v940 = vunpack.c.l.b16 %v861
    %v941 = vunpack.c.h.b16 %v861
    %v942 = vunpack.c.l.b16 %v862
    %v943 = vunpack.c.h.b16 %v862
    %v944 = vunpack.c.l.b16 %v863
    %v945 = vunpack.c.h.b16 %v863
    %v946 = vunpack.c.l.b16 %v864
    %v947 = vunpack.c.h.b16 %v864
    %v948 = vunpack.c.l.b16 %v865
    %v949 = vunpack.c.h.b16 %v865
    %v950 = vunpack.c.l.b16 %v866
    %v951 = vunpack.c.h.b16 %v866
    %v952 = vunpack.c.l.b16 %v867
    %v953 = vunpack.c.h.b16 %v867
    %v954 = vunpack.c.l.b16 %v868
    %v955 = vunpack.c.h.b16 %v868
    %v956 = vunpack.c.l.b16 %v869
    %v957 = vunpack.c.h.b16 %v869
    %v958 = vunpack.c.l.b16 %v870
    %v959 = vunpack.c.h.b16 %v870
    %v960 = vunpack.c.l.b16 %v871
    %v961 = vunpack.c.h.b16 %v871
    %v962 = vunpack.c.l.b16 %v872
    %v963 = vunpack.c.h.b16 %v872
    %v964 = vunpack.c.l.b16 %v873
    %v965 = vunpack.c.h.b16 %v873
    %v966 = vunpack.c.l.b16 %v874
    %v967 = vunpack.c.h.b16 %v874
    %v968 = vunpack.c.l.b16 %v875
    %v969 = vunpack.c.h.b16 %v875
    %v970 = vunpack.c.l.b16 %v876
    %v971 = vunpack.c.h.b16 %v876
    %v972 = vunpack.c.l.b16 %v877
    %v973 = vunpack.c.h.b16 %v877
    %v974 = vunpack.c.l.b16 %v878
    %v975 = vunpack.c.h.b16 %v878
    %v976 = vunpack.c.l.b16 %v879
    %v977 = vunpack.c.h.b16 %v879
    %v978 = vunpack.c.l.b16 %v880
    %v979 = vunpack.c.h.b16 %v880
    %v980 = vunpack.c.l.b16 %v881
    %v981 = vunpack.c.h.b16 %v881
    %v982 = vunpack.c.l.b16 %v882
    %v983 = vunpack.c.h.b16 %v882
    %v984 = vunpack.c.l.b16 %v883
    %v985 = vunpack.c.h.b16 %v883
    %v986 = vunpack.c.l.b16 %v884
    %v987 = vunpack.c.h.b16 %v884
    %v988 = vunpack.c.l.b16 %v885
    %v989 = vunpack.c.h.b16 %v885
    %v990 = vunpack.c.l.b16 %v886
    %v991 = vunpack.c.h.b16 %v886
    %v992 = vunpack.c.l.b16 %v887
    %v993 = vunpack.c.h.b16 %v887
    %v994 = vunpack.c.l.b16 %v888
    %v995 = vunpack.c.h.b16 %v888
    %v996 = vunpack.c.l.b16 %v889
    %v997 = vunpack.c.h.b16 %v889
    %v998 = vpack.c.b16 %v936, %v934
    %v999 = vpack.c.b16 %v937, %v935
    %v1000 = vpack.c.b16 %v940, %v938
    %v1001 = vpack.c.b16 %v941, %v939
    %v1002 = vpack.c.b16 %v944, %v942
    %v1003 = vpack.c.b16 %v945, %v943
    %v1004 = vpack.c.b16 %v948, %v946
    %v1005 = vpack.c.b16 %v949, %v947
    %v1006 = vpack.c.b16 %v952, %v950
    %v1007 = vpack.c.b16 %v953, %v951
    %v1008 = vpack.c.b16 %v956, %v954
    %v1009 = vpack.c.b16 %v957, %v955
    %v1010 = vpack.c.b16 %v960, %v958
    %v1011 = vpack.c.b16 %v961, %v959
    %v1012 = vpack.c.b16 %v964, %v962
    %v1013 = vpack.c.b16 %v965, %v963
    %v1014 = vpack.c.b16 %v968, %v966
    %v1015 = vpack.c.b16 %v969, %v967
    %v1016 = vpack.c.b16 %v972, %v970
    %v1017 = vpack.c.b16 %v973, %v971
    %v1018 = vpack.c.b16 %v976, %v974
    %v1019 = vpack.c.b16 %v977, %v975
    %v1020 = vpack.c.b16 %v980, %v978
    %v1021 = vpack.c.b16 %v981, %v979
    %v1022 = vpack.c.b16 %v984, %v982
    %v1023 = vpack.c.b16 %v985, %v983
    %v1024 = vpack.c.b16 %v988, %v986
    %v1025 = vpack.c.b16 %v989, %v987
    %v1026 = vpack.c.b16 %v992, %v990
    %v1027 = vpack.c.b16 %v993, %v991
    %v1028 = vpack.c.b16 %v996, %v994
    %v1029 = vpack.c.b16 %v997, %v995
    %1062 = vmatprep.subr.bf16.mxu0 %v999
    %1063 = vmatpush1.bf16.msra.mxu0 %v998
    %1064 = vmatprep.subr.bf16.mxu0 %v1001
    %1065 = vmatpush1.bf16.msra.mxu0 %v1000
    %1066 = vmatprep.subr.bf16.mxu0 %v1003
    %1067 = vmatpush1.bf16.msra.mxu0 %v1002
    %1068 = vmatprep.subr.bf16.mxu0 %v1005
    %1069 = vmatpush1.bf16.msra.mxu0 %v1004
    %1070 = vmatprep.subr.bf16.mxu0 %v1007
    %1071 = vmatpush1.bf16.msra.mxu0 %v1006
    %1072 = vmatprep.subr.bf16.mxu0 %v1009
    %1073 = vmatpush1.bf16.msra.mxu0 %v1008
    %1074 = vmatprep.subr.bf16.mxu0 %v1011
    %1075 = vmatpush1.bf16.msra.mxu0 %v1010
    %1076 = vmatprep.subr.bf16.mxu0 %v1013
    %1077 = vmatpush1.bf16.msra.mxu0 %v1012
    %1078 = vmatprep.subr.bf16.mxu0 %v1015
    %1079 = vmatpush1.bf16.msra.mxu0 %v1014
    %1080 = vmatprep.subr.bf16.mxu0 %v1017
    %1081 = vmatpush1.bf16.msra.mxu0 %v1016
    %1082 = vmatprep.subr.bf16.mxu0 %v1019
    %1083 = vmatpush1.bf16.msra.mxu0 %v1018
    %1084 = vmatprep.subr.bf16.mxu0 %v1021
    %1085 = vmatpush1.bf16.msra.mxu0 %v1020
    %1086 = vmatprep.subr.bf16.mxu0 %v1023
    %1087 = vmatpush1.bf16.msra.mxu0 %v1022
    %1088 = vmatprep.subr.bf16.mxu0 %v1025
    %1089 = vmatpush1.bf16.msra.mxu0 %v1024
    %1090 = vmatprep.subr.bf16.mxu0 %v1027
    %1091 = vmatpush1.bf16.msra.mxu0 %v1026
    %1092 = vmatprep.subr.bf16.mxu0 %v1029
    %1093 = vmatpush1.bf16.msra.mxu0 %v1028
    %1094 = vmatprep.mubr.bf16.mxu0 %v857
    %1095 = vmatmul.mubr.bf16.gmra.mrb[0].mxu0 %v856
    %v1096 = vpop.f32.mrb[0].mxu0
    %v1097 = vadd.f32 %v895, %v1096
    %v1098 = vpop.f32.mrb[0].mxu0
    %v1099 = vadd.f32 %v899, %v1098
    %v1100 = vpop.f32.mrb[0].mxu0
    %v1101 = vpop.f32.mrb[0].mxu0
    %1102 = vdwg.mxu0
    %vm1103 = vcmp.gt.f32.partialorder %v1097, 0.0
    %vm1104 = vcmp.gt.f32.partialorder %v1099, 0.0
    %v1105 = vmul.f32 %v1097, 0.2
    %v1106 = vmul.f32 %v1099, 0.2
    %v1107 = vsel %vm1103, %v1097, %v1105
    %v1108 = vsel %vm1104, %v1099, %v1106
    %v1109 = vld [vmem:[%s5] sm:$0x3]
    %v1111 = vlaneseq
    %v1112 = vshrl.u32 %v1111, 7
    %v1113 = vsub.s32 0, %v1112
    %v1114 = vrot.slane %v1109, %v1113
    %v1115 = vlaneseq
    %v1116 = vshrl.u32 %v1115, 7
    %v1117 = vsub.s32 1, %v1116
    %v1118 = vrot.slane %v1109, %v1117
    %v1121 = vmul.f32 %v1107, %v1114
    %v1122 = vmul.f32 %v1108, %v1118
    %v1123 = vadd.f32 %v1121, %v1122
    %1124 = vadd.xlane.f32.xlu0 %v1123
    %v1125 = vpop.xlane.xlu0 %1124
    %v1126 = vld [vmem:[#allocation2] sm:$0x1]
    %v1128 = vlaneseq
    %v1129 = vshrl.u32 %v1128, 7
    %v1130 = vsub.s32 0, %v1129
    %v1131 = vrot.slane %v1126, %v1130
    %v1133 = vadd.f32 %v1125, %v1131
    %v1134 = vsub.f32 0.0, %v1133
    %v1135 = vmul.f32 %v1134, 1.442695
    %v1136 = vpow.pop %v1135
    %v1137 = vadd.f32 %v1136, 1.0
    %v1138 = vrcp.pop %v1137
    %vm1139 = vcmask 7168
    %1140 = vst.msk [vmem:[%s7] sm:$0xff] %vm1139, %v1138
    // Predicated region
    $region42: #{tpu_custom_call.1} parent=1 // pred_check
      _
    $region43: #{tpu_custom_call.1} parent=1 // pred_check_branch
      %1142 = sbr.rel (0) target = $region45
    $region44: #{tpu_custom_call.1} parent=1 // pred_region
      _
    $region45: #{tpu_custom_call.1} parent=1 // pred_fallthru
      _
    // Predicated region
    $region46: #{tpu_custom_call.1} parent=1 // pred_check
      _
    $region47: #{tpu_custom_call.1} parent=1 // pred_check_branch
      %1144 = sbr.rel (0) target = $region49
    $region48: #{tpu_custom_call.1} parent=1 // pred_region
      _
    $region49: #{tpu_custom_call.1} parent=1 // pred_fallthru
      _
    %1145 = vsyncpa [#allocation4], 1
    %1146 = vsyncpa [#allocation6], 1

</llo_original>
